<compile_context>
chip_gen: v5e
topology: v5e:2x2
jax: 0.10.0
libtpu: 0.0.40
codegen_flags: <defaults>
</compile_context>

<pallas_src>
import functools

import jax
import jax.numpy as jnp
from jax.experimental import pallas as pl
from jax.experimental.pallas import tpu as pltpu


# ----------------------------- configuration --------------------------------
B = 2          # batch
C = 8          # n_inputs == n_outputs (required by double_layered)
L = 128        # temporal length (lane-aligned)
K = 3          # kernel_size
DIL = 2        # dilation
STRIDE = 1     # stride (only stride=1 keeps length with circular padding)
PAD = (K - 1) // 2 * DIL
ACT_FUNC = None   # -> nn.Identity (module default)

_ACTIVATIONS = {
    None: lambda x: x,                                   # nn.Identity
    "relu": lambda x: jnp.maximum(x, 0.0),
    "sigmoid": jax.nn.sigmoid,
    "tanh": jnp.tanh,
    "biased_elu": lambda x: jax.nn.elu(x) + 1.0,
    "sinus": jnp.sin,
    "gcu": lambda x: jnp.cos(x) * x,
}


# ------------------------------- kernel --------------------------------------
def _temporal_block_kernel(x_ref, w_ref, o_ref, *, batch, length,
                           kernel_size, dilation, padding, act):
    """Whole batch in one invocation (no grid).

    x_ref : (C_in, B*L)             channels on sublanes, batch*time on lanes
    w_ref : (2, C_out, K*C_in + 1)  fused taps + bias column, per conv layer
    o_ref : (C_out, B*L)
    """
    x = x_ref[...]                                  # (C_in, B*L) f32
    c_in = x.shape[0]
    kc = kernel_size * c_in

    def stack_taps(inp):
        """(C_in, B*L) -> (K*C_in, B*L): rolled tap copies, sublane-stacked."""
        per_batch = []
        for b in range(batch):                      # static; 128-aligned lane slices
            seg = inp[:, b * length:(b + 1) * length]          # (C_in, L)
            rows = []
            for t in range(kernel_size):            # static, fully unrolled
                shift = (padding - t * dilation) % length
                rows.append(seg if shift == 0       # skip the no-op roll
                            else pltpu.roll(seg, shift=shift, axis=1))   # XLU
            per_batch.append(jnp.concatenate(rows, axis=0))    # (K*C_in, L)
        return jnp.concatenate(per_batch, axis=1)              # (K*C_in, B*L)

    def conv(inp, layer):
        wl = w_ref[layer]                           # (C_out, K*C_in + 1)
        w = wl[:, :kc]                              # fused taps (C_out, K*C_in)
        bias = wl[:, kc:kc + 1]                     # (C_out, 1)
        return jnp.dot(w, stack_taps(inp),
                       preferred_element_type=jnp.float32) + bias        # MXU

    # conv1 -> act -> dropout1 (p=0.0: identity) -> conv2 -> identity -> dropout2
    # TODO(synk): training-mode Dropout1d (p > 0) would need pltpu PRNG masking;
    # elided here because the module default is p=0.0 (identity).
    h = act(conv(x, 0))
    out = conv(h, 1)

    # residual (downsample=None since C_in == C_out); relu(clip(v,-10,10)) == clip(v,0,10)
    o_ref[...] = jnp.clip(out + x, 0.0, 10.0).astype(o_ref.dtype)


# ------------------------------- wrapper --------------------------------------
def temporal_block_forward(x, w1, b1, w2, b2, *, kernel_size=K, dilation=DIL,
                           stride=STRIDE, act_func=ACT_FUNC):
    """x: (B, C, L) f32;  w*: (C_out, C_in, K);  b*: (C_out,)."""
    assert stride == 1, "only stride=1 keeps length with circular padding"
    batch, c, length = x.shape
    c_out, c_in, k = w1.shape
    assert k == kernel_size
    assert c == c_in and c_out == c_in, \
        "double_layered TemporalBlock requires n_inputs == n_outputs"
    assert length % 128 == 0, "L must be lane-aligned for the packed layout"
    padding = (kernel_size - 1) // 2 * dilation
    kc = kernel_size * c_in

    # Fuse taps: column (t*C_in + ci) of the fused weight holds w[o, ci, t],
    # matching the sublane order produced by stack_taps.  Bias rides along as
    # the last column so all parameters are a single operand.
    def pack(w, bias):
        wf = jnp.transpose(w, (0, 2, 1)).reshape(c_out, kc)    # (C_out, K*C_in)
        return jnp.concatenate([wf, bias.reshape(c_out, 1)], axis=1)

    wpack = jnp.stack([pack(w1, b1), pack(w2, b2)], axis=0)    # (2, C_out, KC+1)

    # NCW -> lane-dense (C, B*L) slab (plain-XLA layout plumbing, tiny array).
    x2d = jnp.transpose(x, (1, 0, 2)).reshape(c, batch * length)

    kernel = functools.partial(
        _temporal_block_kernel, batch=batch, length=length,
        kernel_size=kernel_size, dilation=dilation, padding=padding,
        act=_ACTIVATIONS[act_func])

    flops = 2 * 2 * c_out * kc * batch * length                # two fused matmuls
    bytes_accessed = 4 * (x2d.size + wpack.size + c_out * batch * length)

    y2d = pl.pallas_call(
        kernel,
        out_shape=jax.ShapeDtypeStruct((c_out, batch * length), x.dtype),
        cost_estimate=pl.CostEstimate(flops=flops, transcendentals=0,
                                      bytes_accessed=bytes_accessed),
    )(x2d, wpack)

    return jnp.transpose(y2d.reshape(c_out, batch, length), (1, 0, 2))


# --------------------------- parameter setup ---------------------------------
def make_weightnorm_conv_params(key, c_out, c_in, k):
    """Mirror nn.utils.weight_norm(Conv1d): W = g * v / ||v||_2 (per out chan)."""
    kv, kg, kb = jax.random.split(key, 3)
    v = 0.01 * jax.random.normal(kv, (c_out, c_in, k), jnp.float32)
    g = 1.0 + 0.1 * jax.random.normal(kg, (c_out,), jnp.float32)
    norm = jnp.sqrt(jnp.sum(v * v, axis=(1, 2), keepdims=True)) + 1e-12
    w = g[:, None, None] * v / norm
    bound = 1.0 / jnp.sqrt(c_in * k)
    bias = jax.random.uniform(kb, (c_out,), jnp.float32, -bound, bound)
    return w, bias


# ------------------------------ reference ------------------------------------
def reference_forward(x, w1, b1, w2, b2):
    """Pure-JAX reference: circular pad + dilated conv, matching PyTorch."""
    def conv(inp, w, bias):
        xp = jnp.pad(inp, ((0, 0), (0, 0), (PAD, PAD)), mode="wrap")
        out = jax.lax.conv_general_dilated(
            xp, w, window_strides=(1,), padding="VALID",
            rhs_dilation=(DIL,), dimension_numbers=("NCH", "OIH", "NCH"))
        return out + bias[None, :, None]

    h = conv(x, w1, b1)
    h = _ACTIVATIONS[ACT_FUNC](h)
    out = conv(h, w2, b2)
    y = jnp.clip(out + x, -10.0, 10.0)
    return jnp.maximum(y, 0.0)


# --------------------------------- main ---------------------------------------
if __name__ == "__main__":
    key = jax.random.PRNGKey(0)
    kx, k1, k2 = jax.random.split(key, 3)

    x = jax.random.normal(kx, (B, C, L), jnp.float32)
    w1, b1 = make_weightnorm_conv_params(k1, C, C, K)
    w2, b2 = make_weightnorm_conv_params(k2, C, C, K)

    y = jax.block_until_ready(temporal_block_forward(x, w1, b1, w2, b2))
    y_ref = jax.block_until_ready(reference_forward(x, w1, b1, w2, b2))

    assert y.shape == (B, C, L)
    assert jnp.allclose(y, y_ref, atol=1e-5, rtol=1e-5), "mismatch vs JAX reference"

    print("KERNEL_OK")
</pallas_src>

<mosaic_0001>
module attributes {stable_mosaic.version = 11 : i64} {
  func.func @_temporal_block_kernel(%arg0: memref<8x256xf32, #tpu.memory_space<vmem>>, %arg1: memref<2x8x25xf32, #tpu.memory_space<vmem>>, %arg2: memref<8x256xf32, #tpu.memory_space<vmem>>) attributes {dimension_semantics = [], scalar_prefetch = 0 : i64, scratch_operands = 0 : i64, tpu.core_type = #tpu.core_type<tc>} {
    %c0 = arith.constant 0 : index
    %c0_0 = arith.constant 0 : index
    %0 = vector.load %arg0[%c0, %c0_0] : memref<8x256xf32, #tpu.memory_space<vmem>>, vector<8x256xf32>
    %c0_1 = arith.constant 0 : index
    %c0_2 = arith.constant 0 : index
    %c0_3 = arith.constant 0 : index
    %1 = vector.load %arg1[%c0_1, %c0_2, %c0_3] : memref<2x8x25xf32, #tpu.memory_space<vmem>>, vector<1x8x25xf32>
    %2 = vector.shape_cast %1 : vector<1x8x25xf32> to vector<8x25xf32>
    %3 = vector.extract_strided_slice %2 {offsets = [0, 0], sizes = [8, 24], strides = [1, 1]} : vector<8x25xf32> to vector<8x24xf32>
    %4 = vector.extract_strided_slice %2 {offsets = [0, 24], sizes = [8, 1], strides = [1, 1]} : vector<8x25xf32> to vector<8x1xf32>
    %5 = vector.extract_strided_slice %0 {offsets = [0, 0], sizes = [8, 128], strides = [1, 1]} : vector<8x256xf32> to vector<8x128xf32>
    %c2_i32 = arith.constant 2 : i32
    %6 = tpu.dynamic_rotate %5 by %c2_i32 dim 1 : vector<8x128xf32>, i32 -> vector<8x128xf32>
    %c126_i32 = arith.constant 126 : i32
    %7 = tpu.dynamic_rotate %5 by %c126_i32 dim 1 : vector<8x128xf32>, i32 -> vector<8x128xf32>
    %8 = tpu.concatenate %6, %5, %7 in 0 : vector<8x128xf32>, vector<8x128xf32>, vector<8x128xf32> -> vector<24x128xf32>
    %9 = vector.extract_strided_slice %0 {offsets = [0, 128], sizes = [8, 128], strides = [1, 1]} : vector<8x256xf32> to vector<8x128xf32>
    %c2_i32_4 = arith.constant 2 : i32
    %10 = tpu.dynamic_rotate %9 by %c2_i32_4 dim 1 : vector<8x128xf32>, i32 -> vector<8x128xf32>
    %c126_i32_5 = arith.constant 126 : i32
    %11 = tpu.dynamic_rotate %9 by %c126_i32_5 dim 1 : vector<8x128xf32>, i32 -> vector<8x128xf32>
    %12 = tpu.concatenate %10, %9, %11 in 0 : vector<8x128xf32>, vector<8x128xf32>, vector<8x128xf32> -> vector<24x128xf32>
    %13 = tpu.concatenate %8, %12 in 1 : vector<24x128xf32>, vector<24x128xf32> -> vector<24x256xf32>
    %cst = arith.constant dense<0.000000e+00> : vector<8x256xf32>
    %14 = tpu.matmul %3, %13, %cst {dimension_numbers = #tpu.dot_dimension_numbers<[1], [0], [0], [1], [0, 0, 1, 1], [], []>} : vector<8x24xf32>, vector<24x256xf32>, vector<8x256xf32> -> vector<8x256xf32>
    %15 = vector.broadcast %4 : vector<8x1xf32> to vector<8x256xf32>
    %16 = arith.addf %14, %15 : vector<8x256xf32>
    %c1 = arith.constant 1 : index
    %c0_6 = arith.constant 0 : index
    %c0_7 = arith.constant 0 : index
    %17 = vector.load %arg1[%c1, %c0_6, %c0_7] : memref<2x8x25xf32, #tpu.memory_space<vmem>>, vector<1x8x25xf32>
    %18 = vector.shape_cast %17 : vector<1x8x25xf32> to vector<8x25xf32>
    %19 = vector.extract_strided_slice %18 {offsets = [0, 0], sizes = [8, 24], strides = [1, 1]} : vector<8x25xf32> to vector<8x24xf32>
    %20 = vector.extract_strided_slice %18 {offsets = [0, 24], sizes = [8, 1], strides = [1, 1]} : vector<8x25xf32> to vector<8x1xf32>
    %21 = vector.extract_strided_slice %16 {offsets = [0, 0], sizes = [8, 128], strides = [1, 1]} : vector<8x256xf32> to vector<8x128xf32>
    %c2_i32_8 = arith.constant 2 : i32
    %22 = tpu.dynamic_rotate %21 by %c2_i32_8 dim 1 : vector<8x128xf32>, i32 -> vector<8x128xf32>
    %c126_i32_9 = arith.constant 126 : i32
    %23 = tpu.dynamic_rotate %21 by %c126_i32_9 dim 1 : vector<8x128xf32>, i32 -> vector<8x128xf32>
    %24 = tpu.concatenate %22, %21, %23 in 0 : vector<8x128xf32>, vector<8x128xf32>, vector<8x128xf32> -> vector<24x128xf32>
    %25 = vector.extract_strided_slice %16 {offsets = [0, 128], sizes = [8, 128], strides = [1, 1]} : vector<8x256xf32> to vector<8x128xf32>
    %c2_i32_10 = arith.constant 2 : i32
    %26 = tpu.dynamic_rotate %25 by %c2_i32_10 dim 1 : vector<8x128xf32>, i32 -> vector<8x128xf32>
    %c126_i32_11 = arith.constant 126 : i32
    %27 = tpu.dynamic_rotate %25 by %c126_i32_11 dim 1 : vector<8x128xf32>, i32 -> vector<8x128xf32>
    %28 = tpu.concatenate %26, %25, %27 in 0 : vector<8x128xf32>, vector<8x128xf32>, vector<8x128xf32> -> vector<24x128xf32>
    %29 = tpu.concatenate %24, %28 in 1 : vector<24x128xf32>, vector<24x128xf32> -> vector<24x256xf32>
    %cst_12 = arith.constant dense<0.000000e+00> : vector<8x256xf32>
    %30 = tpu.matmul %19, %29, %cst_12 {dimension_numbers = #tpu.dot_dimension_numbers<[1], [0], [0], [1], [0, 0, 1, 1], [], []>} : vector<8x24xf32>, vector<24x256xf32>, vector<8x256xf32> -> vector<8x256xf32>
    %31 = vector.broadcast %20 : vector<8x1xf32> to vector<8x256xf32>
    %32 = arith.addf %30, %31 : vector<8x256xf32>
    %33 = arith.addf %32, %0 : vector<8x256xf32>
    %cst_13 = arith.constant 0.000000e+00 : f32
    %cst_14 = arith.constant 1.000000e+01 : f32
    %34 = vector.broadcast %cst_13 : f32 to vector<8x256xf32>
    %35 = arith.maximumf %34, %33 : vector<8x256xf32>
    %36 = vector.broadcast %cst_14 : f32 to vector<8x256xf32>
    %37 = arith.minimumf %36, %35 : vector<8x256xf32>
    %c0_15 = arith.constant 0 : index
    %c0_16 = arith.constant 0 : index
    %38 = vector.load %arg2[%c0_15, %c0_16] : memref<8x256xf32, #tpu.memory_space<vmem>>, vector<8x256xf32>
    tpu.vector_store %arg2[%c0_15, %c0_16], %37 {strides = array<i32>} : memref<8x256xf32, #tpu.memory_space<vmem>>, vector<8x256xf32>,
    return
  }
}

</mosaic_0001>

<llo_original>
// kernel: tpu_custom_call.1
$region0: #{tpu_custom_call.1}
  #allocation0 [shape = 'u32[]', space=smem, size = 0x4, offset = 0x4, fixed_abs, tag = 'smem constant byte address 0x4 - core index']
  #allocation1 [shape = 'u32[72,128]{1,0:T(1,128)}', space=vmem, size = 0x9000, scoped, tag = 'internal scratch']
  %s0 = inlined_call_operand.hbm [shape: f32[8,256], index: 0, kind: input, shape index: {}]
  %s1 = inlined_call_operand.hbm [shape: f32[2,8,25], index: 1, kind: input, shape index: {}]
  %s2 = inlined_call_operand.hbm [shape: f32[8,256], index: 2, kind: output, shape index: {}]
  %s3 = sld [smem:[#allocation0]]
  $region26: #{tpu_custom_call.1} parent=0
    _
  %s5 = ssub.s32 1, %s3
  %s6 = scalar_select 0, %s5, %s3
  $region1: #{tpu_custom_call.1} parent=0
    #allocation2 [shape = 'u8[8192]{0}', space=vmem, size = 0x2000, scoped, tag = 'input window, operand 0, single buffered']
    #allocation3 [shape = 's32[1]{0}', space=sflag, size = 0x4, scoped, tag = 'scoped memory for tpu_custom_call.1']
    #allocation4 [shape = 's32[1]{0}', space=sflag, size = 0x4, scoped, tag = 'scoped memory for tpu_custom_call.1']
    #allocation5 [shape = 'u8[8192]{0}', space=vmem, size = 0x2000, scoped, tag = 'input window, operand 1, single buffered']
    #allocation6 [shape = 's32[1]{0}', space=sflag, size = 0x4, scoped, tag = 'scoped memory for tpu_custom_call.1']
    #allocation7 [shape = 'u8[8192]{0}', space=vmem, size = 0x2000, scoped, tag = 'output window, operand 0, single buffered']
    %7 = vsyncpa [#allocation3], 0
    %8 = vsyncpa [#allocation6], 0
    %9 = vsyncpa [#allocation4], 0
    // Predicated region
    $region2: #{tpu_custom_call.1} parent=1 // pred_check
      _
    $region3: #{tpu_custom_call.1} parent=1 // pred_check_branch
      %11 = sbr.rel (0) target = $region5
    $region4: #{tpu_custom_call.1} parent=1 // pred_region
      %13 = vsyncadd [#allocation3], 0
      %s15 = sshll.u32 %s0, 4
      %s16 = int_to_ptr.hbm [resolvable:$true] %s15
      %s17 = sshll.u32 [#allocation2], 4
      %s18 = int_to_ptr.vmem [resolvable:$true] %s17
      %20 = dma.hbm_to_vmem [thread:$0]  %s16, 256, %s18, [#allocation3]
    $region5: #{tpu_custom_call.1} parent=1 // pred_fallthru
      _
    // Predicated region
    $region6: #{tpu_custom_call.1} parent=1 // pred_check
      _
    $region7: #{tpu_custom_call.1} parent=1 // pred_check_branch
      %22 = sbr.rel (0) target = $region9
    $region8: #{tpu_custom_call.1} parent=1 // pred_region
      %24 = vsyncadd [#allocation6], 0
      %s25 = sshll.u32 %s1, 4
      %s26 = int_to_ptr.hbm [resolvable:$true] %s25
      %s27 = sshll.u32 [#allocation5], 4
      %s28 = int_to_ptr.vmem [resolvable:$true] %s27
      %33 = dma.hbm_to_vmem [thread:$0]  %s26, 256, %s28, [#allocation6], 128, 128, 8
    $region9: #{tpu_custom_call.1} parent=1 // pred_fallthru
      _
    // Predicated region
    $region10: #{tpu_custom_call.1} parent=1 // pred_check
      _
    $region11: #{tpu_custom_call.1} parent=1 // pred_check_branch
      %35 = sbr.rel (0) target = $region13
    $region12: #{tpu_custom_call.1} parent=1 // pred_region
      %37 = dma.done [#allocation3], 256
    $region13: #{tpu_custom_call.1} parent=1 // pred_fallthru
      _
    // Predicated region
    $region14: #{tpu_custom_call.1} parent=1 // pred_check
      _
    $region15: #{tpu_custom_call.1} parent=1 // pred_check_branch
      %39 = sbr.rel (0) target = $region17
    $region16: #{tpu_custom_call.1} parent=1 // pred_region
      %41 = dma.done [#allocation6], 256
    $region17: #{tpu_custom_call.1} parent=1 // pred_fallthru
      _
    %v42 = vld [vmem:[#allocation2] sm:$0xff]
    %v43 = vld [vmem:[#allocation2 + $0x8] sm:$0xff]
    %v44 = vld [vmem:[#allocation5] sm:$0xff]
    %45 = vrot.lane.b32.xlu0 %v42, 2
    %v46 = vpop.permute.xlu0 %45
    %47 = vrot.lane.b32.xlu0 %v42, 126
    %v48 = vpop.permute.xlu0 %47
    %49 = vrot.lane.b32.xlu0 %v43, 2
    %v50 = vpop.permute.xlu0 %49
    %51 = vrot.lane.b32.xlu0 %v43, 126
    %v52 = vpop.permute.xlu0 %51
    %54 = vset.pattern.permute.xlu0 24
    %55 = vperm.xlu0 %54, %v44
    %v56 = vpop.permute.xlu0 %55
    %vm58 = vcmask 195584
    %v59 = vsel %vm58, %v44, 0
    %61 = vmatpush.msra.mxu0 0.0
    %62 = vmatpush.msra.mxu0 0.0
    %63 = vmatpush.msra.mxu0 0.0
    %64 = vmatpush.msra.mxu0 0.0
    %65 = vmatpush.msra.mxu0 0.0
    %66 = vmatpush.msra.mxu0 0.0
    %67 = vmatpush.msra.mxu0 0.0
    %68 = vmatpush.msra.mxu0 0.0
    %69 = vmatpush.msra.mxu0 0.0
    %70 = vmatpush.msra.mxu0 0.0
    %71 = vmatpush.msra.mxu0 0.0
    %72 = vmatpush.msra.mxu0 0.0
    %73 = vmatpush.msra.mxu0 0.0
    %74 = vmatpush.msra.mxu0 %v48
    %75 = vmatpush.msra.mxu0 %v42
    %76 = vmatpush.msra.mxu0 %v46
    %77 = vmatmul.f32.gmra.mxu0 %v59
    %v78 = vpop.f32.mrf.mxu0
    %v79 = vadd.f32 %v56, %v78
    %80 = vdwg.mxu0
    %81 = vmatpush.msra.mxu0 0.0
    %82 = vmatpush.msra.mxu0 0.0
    %83 = vmatpush.msra.mxu0 0.0
    %84 = vmatpush.msra.mxu0 0.0
    %85 = vmatpush.msra.mxu0 0.0
    %86 = vmatpush.msra.mxu0 0.0
    %87 = vmatpush.msra.mxu0 0.0
    %88 = vmatpush.msra.mxu0 0.0
    %89 = vmatpush.msra.mxu0 0.0
    %90 = vmatpush.msra.mxu0 0.0
    %91 = vmatpush.msra.mxu0 0.0
    %92 = vmatpush.msra.mxu0 0.0
    %93 = vmatpush.msra.mxu0 0.0
    %94 = vmatpush.msra.mxu0 %v52
    %95 = vmatpush.msra.mxu0 %v43
    %96 = vmatpush.msra.mxu0 %v50
    %97 = vmatmul.f32.gmra.mxu0 %v59
    %v98 = vpop.f32.mrf.mxu0
    %v99 = vadd.f32 %v56, %v98
    %100 = vdwg.mxu0
    %s101 = scalar_lea.vmem [#allocation5], 8
    %v102 = vld [vmem:[%s101] sm:$0xff]
    %103 = vrot.lane.b32.xlu0 %v79, 2
    %v104 = vpop.permute.xlu0 %103
    %105 = vrot.lane.b32.xlu0 %v79, 126
    %v106 = vpop.permute.xlu0 %105
    %107 = vrot.lane.b32.xlu0 %v99, 2
    %v108 = vpop.permute.xlu0 %107
    %109 = vrot.lane.b32.xlu0 %v99, 126
    %v110 = vpop.permute.xlu0 %109
    %112 = vset.pattern.permute.xlu0 24
    %113 = vperm.xlu0 %112, %v102
    %v114 = vpop.permute.xlu0 %113
    %v116 = vsel %vm58, %v102, 0
    %118 = vmatpush.msra.mxu0 0.0
    %119 = vmatpush.msra.mxu0 0.0
    %120 = vmatpush.msra.mxu0 0.0
    %121 = vmatpush.msra.mxu0 0.0
    %122 = vmatpush.msra.mxu0 0.0
    %123 = vmatpush.msra.mxu0 0.0
    %124 = vmatpush.msra.mxu0 0.0
    %125 = vmatpush.msra.mxu0 0.0
    %126 = vmatpush.msra.mxu0 0.0
    %127 = vmatpush.msra.mxu0 0.0
    %128 = vmatpush.msra.mxu0 0.0
    %129 = vmatpush.msra.mxu0 0.0
    %130 = vmatpush.msra.mxu0 0.0
    %131 = vmatpush.msra.mxu0 %v106
    %132 = vmatpush.msra.mxu0 %v79
    %133 = vmatpush.msra.mxu0 %v104
    %134 = vmatmul.f32.gmra.mxu0 %v116
    %v135 = vpop.f32.mrf.mxu0
    %v136 = vadd.f32 %v114, %v135
    %137 = vdwg.mxu0
    %138 = vmatpush.msra.mxu0 0.0
    %139 = vmatpush.msra.mxu0 0.0
    %140 = vmatpush.msra.mxu0 0.0
    %141 = vmatpush.msra.mxu0 0.0
    %142 = vmatpush.msra.mxu0 0.0
    %143 = vmatpush.msra.mxu0 0.0
    %144 = vmatpush.msra.mxu0 0.0
    %145 = vmatpush.msra.mxu0 0.0
    %146 = vmatpush.msra.mxu0 0.0
    %147 = vmatpush.msra.mxu0 0.0
    %148 = vmatpush.msra.mxu0 0.0
    %149 = vmatpush.msra.mxu0 0.0
    %150 = vmatpush.msra.mxu0 0.0
    %151 = vmatpush.msra.mxu0 %v110
    %152 = vmatpush.msra.mxu0 %v99
    %153 = vmatpush.msra.mxu0 %v108
    %154 = vmatmul.f32.gmra.mxu0 %v116
    %v155 = vpop.f32.mrf.mxu0
    %v156 = vadd.f32 %v114, %v155
    %157 = vdwg.mxu0
    %v158 = vadd.f32 %v136, %v42
    %v159 = vadd.f32 %v156, %v43
    %v160 = vmax.f32 %v158, 0.0
    %v161 = vmax.f32 %v159, 0.0
    %v162 = vmin.f32 %v160, 10.0
    %v163 = vmin.f32 %v161, 10.0
    %164 = vst [vmem:[#allocation7] sm:$0xff] %v162
    %165 = vst [vmem:[#allocation7 + $0x8] sm:$0xff] %v163
    // Predicated region
    $region18: #{tpu_custom_call.1} parent=1 // pred_check
      _
    $region19: #{tpu_custom_call.1} parent=1 // pred_check_branch
      %167 = sbr.rel (0) target = $region21
    $region20: #{tpu_custom_call.1} parent=1 // pred_region
      %169 = vsyncadd [#allocation4], 0
      %s171 = sshll.u32 [#allocation7], 4
      %s172 = int_to_ptr.vmem [resolvable:$true] %s171
      %s173 = sshll.u32 %s2, 4
      %s174 = int_to_ptr.hbm [resolvable:$true] %s173
      %176 = dma.vmem_to_hbm [thread:$0]  %s172, 256, %s174, [#allocation4]
    $region21: #{tpu_custom_call.1} parent=1 // pred_fallthru
      _
    // Predicated region
    $region22: #{tpu_custom_call.1} parent=1 // pred_check
      _
    $region23: #{tpu_custom_call.1} parent=1 // pred_check_branch
      %178 = sbr.rel (0) target = $region25
    $region24: #{tpu_custom_call.1} parent=1 // pred_region
      %180 = dma.done [#allocation4], 256
    $region25: #{tpu_custom_call.1} parent=1 // pred_fallthru
      _
    %181 = vsyncpa [#allocation3], 1
    %182 = vsyncpa [#allocation6], 1
    %183 = vsyncpa [#allocation4], 1

</llo_original>
